<compile_context>
chip_gen: v5e
topology: v5e:2x2
jax: 0.10.0
libtpu: 0.0.40
codegen_flags: <defaults>
</compile_context>

<pallas_src>
import math
from functools import partial

import jax
import jax.numpy as jnp
from jax import lax
from jax.experimental import pallas as pl
from jax.experimental.pallas import tpu as pltpu


def _round_up(x, m):
    return ((x + m - 1) // m) * m


# ----------------- scale + positional encoding (PositionalEncoding) ----------

def _scale_add_pe_kernel(x_ref, pe_ref, o_ref, *, scale):
    # out = x * sqrt(d_model) + pe[s]  (pe broadcast over the batch dim)
    o_ref[...] = x_ref[...] * scale + pe_ref[...]


def pallas_scale_add_pe(x_sbd, pe, scale):
    """x_sbd: (S, B, D) f32, pe: (max_len, D) f32 -> (S, B, D) f32."""
    S, B, D = x_sbd.shape
    pe_s = pe[:S][:, None, :]                     # (S, 1, D); no (S*B, D) blow-up
    ts = S
    if S % 8 == 0:
        for cand in (1024, 512, 256, 128, 64, 32, 16, 8):
            if S % cand == 0:
                ts = cand
                break
    return pl.pallas_call(
        partial(_scale_add_pe_kernel, scale=scale),
        grid=(S // ts,),
        in_specs=[pl.BlockSpec((ts, B, D), lambda i: (i, 0, 0)),
                  pl.BlockSpec((ts, 1, D), lambda i: (i, 0, 0))],
        out_specs=pl.BlockSpec((ts, B, D), lambda i: (i, 0, 0)),
        out_shape=jax.ShapeDtypeStruct((S, B, D), jnp.float32),
        compiler_params=pltpu.CompilerParams(dimension_semantics=("parallel",)),
    )(x_sbd.astype(jnp.float32), pe_s.astype(jnp.float32))


# ----------------------------- tiled linear ----------------------------------

def _linear_kernel(x_ref, w_ref, b_ref, o_ref, acc_ref, *, relu):
    @pl.when(pl.program_id(2) == 0)
    def _():
        acc_ref[...] = jnp.zeros_like(acc_ref)
    # contract last dims (PyTorch weight layout (N, K)); no in-kernel transpose
    acc_ref[...] += lax.dot_general(
        x_ref[...], w_ref[...],
        dimension_numbers=(((1,), (1,)), ((), ())),
        preferred_element_type=jnp.float32)

    @pl.when(pl.program_id(2) == pl.num_programs(2) - 1)
    def _():
        y = acc_ref[...] + b_ref[...]
        if relu:
            y = jnp.maximum(y, 0.0)
        o_ref[...] = y.astype(o_ref.dtype)


def pallas_linear(x, w, b, relu=False, tm_max=256, tk_max=512):
    """y = x @ w.T + b.  bf16 MXU feed, f32 accumulate, lane-dense (128-mult)
    padded output columns (sliced off before returning)."""
    M, K = x.shape
    N = w.shape[0]

    tm = min(tm_max, _round_up(M, 8))
    Mp = _round_up(M, tm)
    Np = _round_up(N, 128)
    tn = 256 if Np % 256 == 0 else 128
    tk = K if K <= tk_max else tk_max
    Kp = _round_up(K, tk)

    xp = jnp.pad(x.astype(jnp.bfloat16), ((0, Mp - M), (0, Kp - K)))
    wp = jnp.pad(w.astype(jnp.bfloat16), ((0, Np - N), (0, Kp - K)))
    bp = jnp.pad(b.astype(jnp.float32), (0, Np - N)).reshape(1, Np)

    out = pl.pallas_call(
        partial(_linear_kernel, relu=relu),
        grid=(Mp // tm, Np // tn, Kp // tk),
        in_specs=[pl.BlockSpec((tm, tk), lambda i, j, k: (i, k)),
                  pl.BlockSpec((tn, tk), lambda i, j, k: (j, k)),
                  pl.BlockSpec((1, tn), lambda i, j, k: (0, j))],
        out_specs=pl.BlockSpec((tm, tn), lambda i, j, k: (i, j)),
        out_shape=jax.ShapeDtypeStruct((Mp, Np), jnp.float32),
        scratch_shapes=[pltpu.VMEM((tm, tn), jnp.float32)],
        compiler_params=pltpu.CompilerParams(
            dimension_semantics=("parallel", "parallel", "arbitrary")),
    )(xp, wp, bp)
    return out[:M, :N]


# ---------------- linear + residual + LayerNorm (fused epilogue) -------------

def _linear_res_ln_kernel(x_ref, w_ref, b_ref, res_ref, g_ref, bb_ref,
                          o_ref, acc_ref, *, eps):
    @pl.when(pl.program_id(1) == 0)
    def _():
        acc_ref[...] = jnp.zeros_like(acc_ref)
    acc_ref[...] += lax.dot_general(
        x_ref[...], w_ref[...],
        dimension_numbers=(((1,), (1,)), ((), ())),
        preferred_element_type=jnp.float32)

    @pl.when(pl.program_id(1) == pl.num_programs(1) - 1)
    def _():
        z = res_ref[...] + acc_ref[...] + b_ref[...]
        mu = jnp.mean(z, axis=-1, keepdims=True)
        var = jnp.mean(jnp.square(z - mu), axis=-1, keepdims=True)
        zn = (z - mu) * lax.rsqrt(var + eps)
        o_ref[...] = (zn * g_ref[...] + bb_ref[...]).astype(o_ref.dtype)


def pallas_linear_add_layernorm(x, w, b, res, gamma, beta, eps=1e-5,
                                tm_max=256, tk_max=512):
    """LayerNorm(res + x @ w.T + b): matmul + residual + LN fused, one HBM pass.
    The feature dim N is kept whole (LN needs the full row)."""
    M, K = x.shape
    N = w.shape[0]

    tm = min(tm_max, _round_up(M, 8))
    Mp = _round_up(M, tm)
    tk = K if K <= tk_max else tk_max
    Kp = _round_up(K, tk)

    xp = jnp.pad(x.astype(jnp.bfloat16), ((0, Mp - M), (0, Kp - K)))
    wp = jnp.pad(w.astype(jnp.bfloat16), ((0, 0), (0, Kp - K)))
    resp = jnp.pad(res.astype(jnp.float32), ((0, Mp - M), (0, 0)))

    out = pl.pallas_call(
        partial(_linear_res_ln_kernel, eps=eps),
        grid=(Mp // tm, Kp // tk),
        in_specs=[pl.BlockSpec((tm, tk), lambda i, k: (i, k)),
                  pl.BlockSpec((N, tk), lambda i, k: (0, k)),
                  pl.BlockSpec((1, N), lambda i, k: (0, 0)),
                  pl.BlockSpec((tm, N), lambda i, k: (i, 0)),
                  pl.BlockSpec((1, N), lambda i, k: (0, 0)),
                  pl.BlockSpec((1, N), lambda i, k: (0, 0))],
        out_specs=pl.BlockSpec((tm, N), lambda i, k: (i, 0)),
        out_shape=jax.ShapeDtypeStruct((Mp, N), jnp.float32),
        scratch_shapes=[pltpu.VMEM((tm, N), jnp.float32)],
        compiler_params=pltpu.CompilerParams(
            dimension_semantics=("parallel", "arbitrary")),
    )(xp, wp, b.reshape(1, N).astype(jnp.float32), resp,
      gamma.reshape(1, N).astype(jnp.float32),
      beta.reshape(1, N).astype(jnp.float32))
    return out[:M]


# ------------------------------- attention -----------------------------------

def _attn_kernel(q_ref, k_ref, v_ref, o_ref, *, scale):
    q = q_ref[...]                                     # (bh_t, S, Dh) bf16
    k = k_ref[...]
    v = v_ref[...]
    s = jnp.einsum('bqd,bkd->bqk', q, k,
                   preferred_element_type=jnp.float32) * scale
    # causal mask generated in-kernel (no S x S HBM mask DMA)
    qi = lax.broadcasted_iota(jnp.int32, s.shape, 1)
    ki = lax.broadcasted_iota(jnp.int32, s.shape, 2)
    s = jnp.where(ki <= qi, s, -1e30)
    m = jnp.max(s, axis=-1, keepdims=True)
    e = jnp.exp(s - m)
    p = e * pl.reciprocal(jnp.sum(e, axis=-1, keepdims=True), approx=True)
    o_ref[...] = jnp.einsum('bqk,bkd->bqd', p.astype(v.dtype), v,
                            preferred_element_type=jnp.float32
                            ).astype(o_ref.dtype)


def pallas_attention(q, k, v, scale):
    """q, k, v: (B*H, S, Dh).  Several (batch,head) slices per grid step."""
    BH, S, Dh = q.shape
    bh_t = BH
    for cand in (16, 8, 4, 2, 1):
        if BH % cand == 0:
            bh_t = min(cand, BH)
            break
    spec = pl.BlockSpec((bh_t, S, Dh), lambda i: (i, 0, 0))
    return pl.pallas_call(
        partial(_attn_kernel, scale=scale),
        grid=(BH // bh_t,),
        in_specs=[spec, spec, spec],
        out_specs=spec,
        out_shape=jax.ShapeDtypeStruct((BH, S, Dh), jnp.float32),
        compiler_params=pltpu.CompilerParams(dimension_semantics=("parallel",)),
    )(q.astype(jnp.bfloat16), k.astype(jnp.bfloat16), v.astype(jnp.bfloat16))


# ------------------------- parameters / buffers ------------------------------

def positional_encoding(max_len, d_model):
    position = jnp.arange(max_len, dtype=jnp.float32)[:, None]
    div_term = jnp.exp(jnp.arange(0, d_model, 2, dtype=jnp.float32)
                       * (-math.log(10000.0) / d_model))
    pe = jnp.zeros((max_len, d_model), dtype=jnp.float32)
    pe = pe.at[:, 0::2].set(jnp.sin(position * div_term))
    pe = pe.at[:, 1::2].set(jnp.cos(position * div_term))
    return pe  # (max_len, d_model)


def init_params(key, ntoken, ninp, nhead, nhid, nlayers):
    del nhead  # head split done at forward time
    keys = jax.random.split(key, 2 + nlayers)

    def u(k, shape, fan_in):
        bound = 1.0 / math.sqrt(fan_in)
        return jax.random.uniform(k, shape, minval=-bound, maxval=bound,
                                  dtype=jnp.float32)

    params = {
        "emb": jax.random.uniform(keys[0], (ntoken, ninp), minval=-0.1,
                                  maxval=0.1, dtype=jnp.float32),
        "dec_w": jax.random.uniform(keys[1], (ntoken, ninp), minval=-0.1,
                                    maxval=0.1, dtype=jnp.float32),
        "dec_b": jnp.zeros((ntoken,), dtype=jnp.float32),
        "layers": [],
    }
    for l in range(nlayers):
        lk = jax.random.split(keys[2 + l], 6)
        params["layers"].append(dict(
            in_proj_w=u(lk[0], (3 * ninp, ninp), ninp),
            in_proj_b=jnp.zeros((3 * ninp,), dtype=jnp.float32),
            out_w=u(lk[1], (ninp, ninp), ninp),
            out_b=jnp.zeros((ninp,), dtype=jnp.float32),
            lin1_w=u(lk[2], (nhid, ninp), ninp),
            lin1_b=u(lk[3], (nhid,), ninp),
            lin2_w=u(lk[4], (ninp, nhid), nhid),
            lin2_b=u(lk[5], (ninp,), nhid),
            ln1_g=jnp.ones((ninp,), dtype=jnp.float32),
            ln1_b=jnp.zeros((ninp,), dtype=jnp.float32),
            ln2_g=jnp.ones((ninp,), dtype=jnp.float32),
            ln2_b=jnp.zeros((ninp,), dtype=jnp.float32),
        ))
    return params


# -------------------------------- forward ------------------------------------

def transformer_forward(params, tokens, ninp, nhead, pe):
    S, B = tokens.shape
    D = ninp
    H = nhead
    Dh = D // H

    # Embedding lookup (gather) stays as XLA glue; *sqrt(D) + PositionalEncoding
    # (dropout = identity, eval semantics) is one fused Pallas kernel.
    x = params["emb"][tokens]                            # (S, B, D)
    x = pallas_scale_add_pe(x, pe, math.sqrt(D))         # (S, B, D)
    x2d = x.reshape(S * B, D)                            # row = s*B + b

    for layer in params["layers"]:
        # --- multi-head self-attention (post-norm TransformerEncoderLayer) ---
        qkv = pallas_linear(x2d, layer["in_proj_w"], layer["in_proj_b"])
        q, k, v = jnp.split(qkv, 3, axis=-1)

        def to_heads(t):
            return (t.reshape(S, B, H, Dh)
                     .transpose(1, 2, 0, 3)
                     .reshape(B * H, S, Dh))

        attn = pallas_attention(to_heads(q), to_heads(k), to_heads(v),
                                1.0 / math.sqrt(Dh))      # (B*H, S, Dh)
        attn = (attn.reshape(B, H, S, Dh)
                    .transpose(2, 0, 1, 3)
                    .reshape(S * B, D))
        # out-proj + residual add + LayerNorm fused into one kernel
        x2d = pallas_linear_add_layernorm(attn, layer["out_w"], layer["out_b"],
                                          x2d, layer["ln1_g"], layer["ln1_b"])

        # --- feed-forward: lin1(+ReLU), then lin2 + residual + LayerNorm fused
        h = pallas_linear(x2d, layer["lin1_w"], layer["lin1_b"], relu=True)
        x2d = pallas_linear_add_layernorm(h, layer["lin2_w"], layer["lin2_b"],
                                          x2d, layer["ln2_g"], layer["ln2_b"])

    out = pallas_linear(x2d, params["dec_w"], params["dec_b"])   # (S*B, ntoken)
    return out.reshape(S, B, -1)


# --------------------------------- main --------------------------------------

if __name__ == "__main__":
    ntoken, ninp, nhead, nhid, nlayers = 50, 32, 2, 64, 2
    S, B = 8, 2

    key = jax.random.PRNGKey(0)
    pkey, tkey = jax.random.split(key)

    params = init_params(pkey, ntoken, ninp, nhead, nhid, nlayers)
    tokens = jax.random.randint(tkey, (S, B), 0, ntoken, dtype=jnp.int32)
    pe = positional_encoding(5000, ninp)     # max_len=5000, as in the module

    # Check the PositionalEncoding kernel against a pure-JAX reference (f32 path).
    x_emb = params["emb"][tokens]
    pe_out = jax.block_until_ready(
        pallas_scale_add_pe(x_emb, pe, math.sqrt(ninp)))
    pe_ref = x_emb * math.sqrt(ninp) + pe[:S][:, None, :]
    assert jnp.allclose(pe_out, pe_ref, rtol=1e-5, atol=1e-5)

    out = transformer_forward(params, tokens, ninp, nhead, pe)
    out = jax.block_until_ready(out)

    assert out.shape == (S, B, ntoken), out.shape
    assert bool(jnp.all(jnp.isfinite(out)))
    print("KERNEL_OK")
</pallas_src>

<mosaic_0001>
module attributes {stable_mosaic.version = 11 : i64} {
  func.func @_scale_add_pe_kernel(%arg0: i32, %arg1: memref<8x2x32xf32, #tpu.memory_space<vmem>>, %arg2: memref<8x1x32xf32, #tpu.memory_space<vmem>>, %arg3: memref<8x2x32xf32, #tpu.memory_space<vmem>>) attributes {dimension_semantics = [#tpu.dimension_semantics<parallel>], iteration_bounds = array<i64: 1>, scalar_prefetch = 0 : i64, scratch_operands = 0 : i64, tpu.core_type = #tpu.core_type<tc>, window_params = [{transform_indices = @transform_0, window_bounds = array<i64: 8, 2, 32>}, {transform_indices = @transform_1, window_bounds = array<i64: 8, 1, 32>}, {transform_indices = @transform_2, window_bounds = array<i64: 8, 2, 32>}]} {
    %c0 = arith.constant 0 : index
    %c0_0 = arith.constant 0 : index
    %c0_1 = arith.constant 0 : index
    %0 = vector.load %arg1[%c0, %c0_0, %c0_1] : memref<8x2x32xf32, #tpu.memory_space<vmem>>, vector<8x2x32xf32>
    %cst = arith.constant 5.65685415 : f32
    %1 = vector.broadcast %cst : f32 to vector<8x2x32xf32>
    %2 = arith.mulf %0, %1 : vector<8x2x32xf32>
    %c0_2 = arith.constant 0 : index
    %c0_3 = arith.constant 0 : index
    %c0_4 = arith.constant 0 : index
    %3 = vector.load %arg2[%c0_2, %c0_3, %c0_4] : memref<8x1x32xf32, #tpu.memory_space<vmem>>, vector<8x1x32xf32>
    %4 = vector.broadcast %3 : vector<8x1x32xf32> to vector<8x2x32xf32>
    %5 = arith.addf %2, %4 : vector<8x2x32xf32>
    %c0_5 = arith.constant 0 : index
    %c0_6 = arith.constant 0 : index
    %c0_7 = arith.constant 0 : index
    %6 = vector.load %arg3[%c0_5, %c0_6, %c0_7] : memref<8x2x32xf32, #tpu.memory_space<vmem>>, vector<8x2x32xf32>
    tpu.vector_store %arg3[%c0_5, %c0_6, %c0_7], %5 {strides = array<i32>} : memref<8x2x32xf32, #tpu.memory_space<vmem>>, vector<8x2x32xf32>,
    return
  }
  func.func @transform_0(%arg0: i32) -> (i32, i32, i32) {
    %c0_i32 = arith.constant 0 : i32
    %c0_i32_0 = arith.constant 0 : i32
    %c0_i32_1 = arith.constant 0 : i32
    return %arg0, %c0_i32, %c0_i32_0 : i32, i32, i32
  }
  func.func @transform_1(%arg0: i32) -> (i32, i32, i32) {
    %c0_i32 = arith.constant 0 : i32
    %c0_i32_0 = arith.constant 0 : i32
    %c0_i32_1 = arith.constant 0 : i32
    return %arg0, %c0_i32, %c0_i32_0 : i32, i32, i32
  }
  func.func @transform_2(%arg0: i32) -> (i32, i32, i32) {
    %c0_i32 = arith.constant 0 : i32
    %c0_i32_0 = arith.constant 0 : i32
    %c0_i32_1 = arith.constant 0 : i32
    return %arg0, %c0_i32, %c0_i32_0 : i32, i32, i32
  }
}

</mosaic_0001>

<llo_original>
// kernel: tpu_custom_call.1
$region0: #{tpu_custom_call.1}
  #allocation0 [shape = 'u32[]', space=smem, size = 0x4, offset = 0x4, fixed_abs, tag = 'smem constant byte address 0x4 - core index']
  #allocation1 [shape = 'u32[72,128]{1,0:T(1,128)}', space=vmem, size = 0x9000, scoped, tag = 'internal scratch']
  %s0 = inlined_call_operand.hbm [shape: f32[8,2,32], index: 0, kind: input, shape index: {}]
  %s1 = inlined_call_operand.hbm [shape: f32[8,1,32], index: 1, kind: input, shape index: {}]
  %s2 = inlined_call_operand.hbm [shape: f32[8,2,32], index: 2, kind: output, shape index: {}]
  %s3 = sld [smem:[#allocation0]]
  $region26: #{tpu_custom_call.1} parent=0
    _
  %s5 = ssub.s32 1, %s3
  %s6 = scalar_select 0, %s5, %s3
  $region1: #{tpu_custom_call.1} parent=0
    #allocation2 [shape = 'u8[8192]{0}', space=vmem, size = 0x2000, scoped, tag = 'input window, operand 0, single buffered']
    #allocation3 [shape = 's32[1]{0}', space=sflag, size = 0x4, scoped, tag = 'scoped memory for tpu_custom_call.1']
    #allocation4 [shape = 's32[1]{0}', space=sflag, size = 0x4, scoped, tag = 'scoped memory for tpu_custom_call.1']
    #allocation5 [shape = 'u8[4096]{0}', space=vmem, size = 0x1000, scoped, tag = 'input window, operand 1, single buffered']
    #allocation6 [shape = 's32[1]{0}', space=sflag, size = 0x4, scoped, tag = 'scoped memory for tpu_custom_call.1']
    #allocation7 [shape = 'u8[8192]{0}', space=vmem, size = 0x2000, scoped, tag = 'output window, operand 0, single buffered']
    %7 = vsyncpa [#allocation3], 0
    %8 = vsyncpa [#allocation6], 0
    %9 = vsyncpa [#allocation4], 0
    // Predicated region
    $region2: #{tpu_custom_call.1} parent=1 // pred_check
      _
    $region3: #{tpu_custom_call.1} parent=1 // pred_check_branch
      %11 = sbr.rel (0) target = $region5
    $region4: #{tpu_custom_call.1} parent=1 // pred_region
      %13 = vsyncadd [#allocation3], 0
      %s14 = sshll.u32 %s0, 4
      %s15 = int_to_ptr.hbm [resolvable:$true] %s14
      %s16 = sshll.u32 [#allocation2], 4
      %s17 = int_to_ptr.vmem [resolvable:$true] %s16
      %22 = dma.hbm_to_vmem [thread:$0]  %s15, 256, %s17, [#allocation3], 32, 32, 2
    $region5: #{tpu_custom_call.1} parent=1 // pred_fallthru
      _
    // Predicated region
    $region6: #{tpu_custom_call.1} parent=1 // pred_check
      _
    $region7: #{tpu_custom_call.1} parent=1 // pred_check_branch
      %24 = sbr.rel (0) target = $region9
    $region8: #{tpu_custom_call.1} parent=1 // pred_region
      %26 = vsyncadd [#allocation6], 0
      %s27 = sshll.u32 %s1, 4
      %s28 = int_to_ptr.hbm [resolvable:$true] %s27
      %s29 = sshll.u32 [#allocation5], 4
      %s30 = int_to_ptr.vmem [resolvable:$true] %s29
      %35 = dma.hbm_to_vmem [thread:$0]  %s28, 128, %s30, [#allocation6], 16, 16, 1
    $region9: #{tpu_custom_call.1} parent=1 // pred_fallthru
      _
    // Predicated region
    $region10: #{tpu_custom_call.1} parent=1 // pred_check
      _
    $region11: #{tpu_custom_call.1} parent=1 // pred_check_branch
      %37 = sbr.rel (0) target = $region13
    $region12: #{tpu_custom_call.1} parent=1 // pred_region
      %39 = dma.done [#allocation3], 256
    $region13: #{tpu_custom_call.1} parent=1 // pred_fallthru
      _
    // Predicated region
    $region14: #{tpu_custom_call.1} parent=1 // pred_check
      _
    $region15: #{tpu_custom_call.1} parent=1 // pred_check_branch
      %41 = sbr.rel (0) target = $region17
    $region16: #{tpu_custom_call.1} parent=1 // pred_region
      %43 = dma.done [#allocation6], 128
    $region17: #{tpu_custom_call.1} parent=1 // pred_fallthru
      _
    %v44 = vld [vmem:[#allocation2] sm:$0x3]
    %v45 = vld [vmem:[#allocation2 + $0x2] sm:$0x3]
    %v46 = vld [vmem:[#allocation2 + $0x4] sm:$0x3]
    %v47 = vld [vmem:[#allocation2 + $0x6] sm:$0x3]
    %v48 = vld [vmem:[#allocation2 + $0x8] sm:$0x3]
    %v49 = vld [vmem:[#allocation2 + $0xa] sm:$0x3]
    %v50 = vld [vmem:[#allocation2 + $0xc] sm:$0x3]
    %v51 = vld [vmem:[#allocation2 + $0xe] sm:$0x3]
    %v52 = vmul.f32 %v44, 5.656854
    %v53 = vmul.f32 %v45, 5.656854
    %v54 = vmul.f32 %v46, 5.656854
    %v55 = vmul.f32 %v47, 5.656854
    %v56 = vmul.f32 %v48, 5.656854
    %v57 = vmul.f32 %v49, 5.656854
    %v58 = vmul.f32 %v50, 5.656854
    %v59 = vmul.f32 %v51, 5.656854
    %v60 = vld [vmem:[#allocation5] sm:$0x1]
    %v61 = vld [vmem:[#allocation5 + $0x1] sm:$0x1]
    %v62 = vld [vmem:[#allocation5 + $0x2] sm:$0x1]
    %v63 = vld [vmem:[#allocation5 + $0x3] sm:$0x1]
    %v64 = vld [vmem:[#allocation5 + $0x4] sm:$0x1]
    %v65 = vld [vmem:[#allocation5 + $0x5] sm:$0x1]
    %v66 = vld [vmem:[#allocation5 + $0x6] sm:$0x1]
    %v67 = vld [vmem:[#allocation5 + $0x7] sm:$0x1]
    %v76 = vperm.slane %v60, 0
    %v77 = vperm.slane %v61, 0
    %v78 = vperm.slane %v62, 0
    %v79 = vperm.slane %v63, 0
    %v80 = vperm.slane %v64, 0
    %v81 = vperm.slane %v65, 0
    %v82 = vperm.slane %v66, 0
    %v83 = vperm.slane %v67, 0
    %v92 = vadd.f32 %v52, %v76
    %v93 = vadd.f32 %v53, %v77
    %v94 = vadd.f32 %v54, %v78
    %v95 = vadd.f32 %v55, %v79
    %v96 = vadd.f32 %v56, %v80
    %v97 = vadd.f32 %v57, %v81
    %v98 = vadd.f32 %v58, %v82
    %v99 = vadd.f32 %v59, %v83
    %vm100 = vcmask 254976
    %101 = vst.msk [vmem:[#allocation7] sm:$0x3] %vm100, %v92
    %102 = vst.msk [vmem:[#allocation7 + $0x2] sm:$0x3] %vm100, %v93
    %103 = vst.msk [vmem:[#allocation7 + $0x4] sm:$0x3] %vm100, %v94
    %104 = vst.msk [vmem:[#allocation7 + $0x6] sm:$0x3] %vm100, %v95
    %105 = vst.msk [vmem:[#allocation7 + $0x8] sm:$0x3] %vm100, %v96
    %106 = vst.msk [vmem:[#allocation7 + $0xa] sm:$0x3] %vm100, %v97
    %107 = vst.msk [vmem:[#allocation7 + $0xc] sm:$0x3] %vm100, %v98
    %108 = vst.msk [vmem:[#allocation7 + $0xe] sm:$0x3] %vm100, %v99
    // Predicated region
    $region18: #{tpu_custom_call.1} parent=1 // pred_check
      _
    $region19: #{tpu_custom_call.1} parent=1 // pred_check_branch
      %110 = sbr.rel (0) target = $region21
    $region20: #{tpu_custom_call.1} parent=1 // pred_region
      %112 = vsyncadd [#allocation4], 0
      %s113 = sshll.u32 [#allocation7], 4
      %s114 = int_to_ptr.vmem [resolvable:$true] %s113
      %s115 = sshll.u32 %s2, 4
      %s116 = int_to_ptr.hbm [resolvable:$true] %s115
      %121 = dma.vmem_to_hbm [thread:$0]  %s114, 256, %s116, [#allocation4], 32, 32, 2
    $region21: #{tpu_custom_call.1} parent=1 // pred_fallthru
      _
    // Predicated region
    $region22: #{tpu_custom_call.1} parent=1 // pred_check
      _
    $region23: #{tpu_custom_call.1} parent=1 // pred_check_branch
      %123 = sbr.rel (0) target = $region25
    $region24: #{tpu_custom_call.1} parent=1 // pred_region
      %125 = dma.done [#allocation4], 256
    $region25: #{tpu_custom_call.1} parent=1 // pred_fallthru
      _
    %126 = vsyncpa [#allocation3], 1
    %127 = vsyncpa [#allocation6], 1
    %128 = vsyncpa [#allocation4], 1

</llo_original>
